<compile_context>
chip_gen: v5e
topology: v5e:2x2
jax: 0.10.0
libtpu: 0.0.40
codegen_flags: <defaults>
</compile_context>

<pallas_src>
import math
import functools

import jax
import jax.numpy as jnp
import numpy as np
from jax.experimental import pallas as pl
from jax.experimental.pallas import tpu as pltpu

A_PAD = 128  # lane-padded per-head width; real action dims live in lanes [0, A)


def _gelu_exact(x):
    # Matches torch.nn.GELU() default (erf-based, not tanh approximation).
    return 0.5 * x * (1.0 + jax.lax.erf(x * (1.0 / math.sqrt(2.0))))


def actor_kernel(x_ref, w1_ref, w2_ref, w3_ref, wh_ref, consts_ref, eps_ref,
                 out_ref, *, action_dim):
    unit = w1_ref.shape[1]

    # One load of the consolidated constants block, sliced in-register.
    consts = consts_ref[...]                        # (8, CW) f32
    b1 = consts[0:1, :unit]
    b2 = consts[1:2, :unit]
    b3 = consts[2:3, :unit]
    b_head = consts[3:4, :2 * A_PAD]                # [bm_pad | bs_pad]
    scale = consts[4:5, :action_dim]                # (1, A)
    center = consts[4:5, A_PAD:A_PAD + action_dim]  # (1, A)

    # hidden_layers: 3x (Linear -> GELU). bf16 MXU inputs, f32 accumulation,
    # f32 elementwise (erf-exact GELU, matches torch default).
    x = x_ref[...]
    h = _gelu_exact(jnp.dot(x.astype(jnp.bfloat16), w1_ref[...],
                            preferred_element_type=jnp.float32) + b1)
    h = _gelu_exact(jnp.dot(h.astype(jnp.bfloat16), w2_ref[...],
                            preferred_element_type=jnp.float32) + b2)
    h = _gelu_exact(jnp.dot(h.astype(jnp.bfloat16), w3_ref[...],
                            preferred_element_type=jnp.float32) + b3)

    # Fused mean/log_std head: one matmul, split at the aligned 128-lane
    # boundary; only the first `action_dim` lanes of each half are real.
    ms = jnp.dot(h.astype(jnp.bfloat16), wh_ref[...],
                 preferred_element_type=jnp.float32) + b_head

    # Narrow (tb, action_dim) tail: sampling / squash / log_prob.
    mean = ms[:, :action_dim]
    log_std = jnp.clip(ms[:, A_PAD:A_PAD + action_dim], -20.0, 2.0)
    std = jnp.exp(log_std)

    # reparameterized sample: x_t = mean + std * eps
    eps = eps_ref[...]                              # (tb, action_dim) f32
    x_t = mean + std * eps
    y_t = jnp.tanh(x_t)
    action = y_t * scale + center

    # Normal(mean, std).log_prob(x_t); note (x_t - mean)/std == eps.
    log2pi = jnp.float32(math.log(2.0 * math.pi))
    log_prob = (-0.5 * eps * eps - log_std - 0.5 * log2pi
                - jnp.log(scale * (1.0 - y_t * y_t) + 1e-6))
    logp = jnp.sum(log_prob, axis=1, keepdims=True)  # (tb, 1)

    # Single (tb, 128) output slab: action in lanes [0, A), logp in lane 127.
    # (Unwritten lanes are never read by the wrapper.)
    out_ref[:, :action_dim] = action
    out_ref[:, A_PAD - 1:A_PAD] = logp


def pack_params(params, action_scale, action_center, action_dim):
    """Fuse head weights, consolidate biases/scale/center, cast weights to bf16."""
    assert 0 < action_dim < A_PAD, "lane 127 is reserved for log_prob"
    unit = params["w1"].shape[1]
    cw = max(unit, 2 * A_PAD)

    consts = jnp.zeros((8, cw), jnp.float32)
    consts = consts.at[0, :unit].set(params["b1"].reshape(-1))
    consts = consts.at[1, :unit].set(params["b2"].reshape(-1))
    consts = consts.at[2, :unit].set(params["b3"].reshape(-1))
    consts = consts.at[3, :action_dim].set(params["bm"].reshape(-1))
    consts = consts.at[3, A_PAD:A_PAD + action_dim].set(params["bs"].reshape(-1))
    consts = consts.at[4, :action_dim].set(action_scale.reshape(-1))
    consts = consts.at[4, A_PAD:A_PAD + action_dim].set(action_center.reshape(-1))

    wh = jnp.zeros((unit, 2 * A_PAD), jnp.float32)
    wh = wh.at[:, :action_dim].set(params["wm"])
    wh = wh.at[:, A_PAD:A_PAD + action_dim].set(params["ws"])

    return {
        "w1": params["w1"].astype(jnp.bfloat16),
        "w2": params["w2"].astype(jnp.bfloat16),
        "w3": params["w3"].astype(jnp.bfloat16),
        "wh": wh.astype(jnp.bfloat16),
        "consts": consts,
    }


def _choose_batch_tile(B, cap=1024):
    """Largest multiple-of-8 divisor of B that is <= cap.  For B >= 16 the
    tile is additionally capped near B/2 so the grid has >= 2 steps (lets the
    'parallel' batch axis shard across both v7x TensorCores).  Falls back to a
    single full-batch tile when no such divisor exists (ragged B)."""
    if B <= 8:
        return B
    target = min(cap, B)
    if B >= 16:
        target = min(target, max(8, (B // 2) // 8 * 8))
    best = None
    for t in range(8, target + 1, 8):
        if B % t == 0:
            best = t
    return best if best is not None else B


@functools.partial(jax.jit, static_argnames=("action_dim",))
def actor_forward(x, packed, eps, *, action_dim):
    B, repr_dim = x.shape
    unit = packed["w1"].shape[1]
    cw = packed["consts"].shape[1]
    assert 0 < action_dim < A_PAD

    eps = eps.astype(jnp.float32)          # (B, action_dim) — no lane padding
    tb = _choose_batch_tile(B)
    grid = (B // tb,)

    args = (x, packed["w1"], packed["w2"], packed["w3"], packed["wh"],
            packed["consts"], eps)
    flops = 2 * B * (repr_dim * unit + 2 * unit * unit + unit * 2 * A_PAD)
    transcendentals = B * (3 * unit + 3 * action_dim)   # erf x3, exp, tanh, log
    bytes_accessed = (sum(int(np.prod(a.shape)) * a.dtype.itemsize for a in args)
                      + B * A_PAD * 4)

    out = pl.pallas_call(
        functools.partial(actor_kernel, action_dim=action_dim),
        out_shape=jax.ShapeDtypeStruct((B, A_PAD), jnp.float32),
        grid=grid,
        in_specs=[
            pl.BlockSpec((tb, repr_dim), lambda i: (i, 0)),      # x
            pl.BlockSpec((repr_dim, unit), lambda i: (0, 0)),    # w1 (bf16)
            pl.BlockSpec((unit, unit), lambda i: (0, 0)),        # w2 (bf16)
            pl.BlockSpec((unit, unit), lambda i: (0, 0)),        # w3 (bf16)
            pl.BlockSpec((unit, 2 * A_PAD), lambda i: (0, 0)),   # fused head (bf16)
            pl.BlockSpec((8, cw), lambda i: (0, 0)),             # consts
            pl.BlockSpec((tb, action_dim), lambda i: (i, 0)),    # eps (narrow)
        ],
        out_specs=pl.BlockSpec((tb, A_PAD), lambda i: (i, 0)),
        compiler_params=pltpu.CompilerParams(
            dimension_semantics=("parallel",),
            vmem_limit_bytes=32 * 1024 * 1024),
        cost_estimate=pl.CostEstimate(
            flops=flops, transcendentals=transcendentals,
            bytes_accessed=bytes_accessed),
    )(*args)

    action = out[:, :action_dim]
    log_prob = out[:, A_PAD - 1:A_PAD]
    return action, log_prob


def actor_forward_ref(x, params, eps, action_scale, action_center):
    """Pure-JAX reference mirroring the PyTorch forward (same bf16-matmul path)."""
    def mm(a, w):
        return jnp.dot(a.astype(jnp.bfloat16), w.astype(jnp.bfloat16),
                       preferred_element_type=jnp.float32)
    h = _gelu_exact(mm(x, params["w1"]) + params["b1"])
    h = _gelu_exact(mm(h, params["w2"]) + params["b2"])
    h = _gelu_exact(mm(h, params["w3"]) + params["b3"])
    mean = mm(h, params["wm"]) + params["bm"]
    log_std = jnp.clip(mm(h, params["ws"]) + params["bs"], -20.0, 2.0)
    std = jnp.exp(log_std)
    x_t = mean + std * eps
    y_t = jnp.tanh(x_t)
    action = y_t * action_scale + action_center
    log_prob = (-0.5 * ((x_t - mean) / std) ** 2 - log_std
                - 0.5 * math.log(2.0 * math.pi))
    log_prob = log_prob - jnp.log(action_scale * (1.0 - y_t ** 2) + 1e-6)
    return action, jnp.sum(log_prob, axis=1, keepdims=True)


def init_params(key, repr_dim, unit_dim, action_dim):
    """Deterministic synthetic weights (PyTorch-Linear-like uniform init)."""
    ks = jax.random.split(key, 10)

    def linear(kw, kb, fan_in, fan_out):
        bound = 1.0 / math.sqrt(fan_in)
        w = jax.random.uniform(kw, (fan_in, fan_out), jnp.float32, -bound, bound)
        b = jax.random.uniform(kb, (1, fan_out), jnp.float32, -bound, bound)
        return w, b

    p = {}
    p["w1"], p["b1"] = linear(ks[0], ks[1], repr_dim, unit_dim)
    p["w2"], p["b2"] = linear(ks[2], ks[3], unit_dim, unit_dim)
    p["w3"], p["b3"] = linear(ks[4], ks[5], unit_dim, unit_dim)
    p["wm"], p["bm"] = linear(ks[6], ks[7], unit_dim, action_dim)
    p["ws"], p["bs"] = linear(ks[8], ks[9], unit_dim, action_dim)
    return p


if __name__ == "__main__":
    # Small but MXU/lane-aligned problem; unit_dim=256 is the module default.
    B, REPR_DIM, UNIT_DIM, ACTION_DIM = 8, 128, 256, 2

    key = jax.random.PRNGKey(0)
    k_x, k_eps, k_p = jax.random.split(key, 3)

    x = jax.random.normal(k_x, (B, REPR_DIM), jnp.float32)
    eps = jax.random.normal(k_eps, (B, ACTION_DIM), jnp.float32)  # rsample noise
    params = init_params(k_p, REPR_DIM, UNIT_DIM, ACTION_DIM)

    # synthetic gym.Box action space: low/high per action dim
    low = np.array([-1.0, -2.0], dtype=np.float32)
    high = np.array([1.0, 2.0], dtype=np.float32)
    center_np = (high + low) / 2.0
    scale_np = high - center_np
    action_center = jnp.asarray(center_np).reshape(1, ACTION_DIM)
    action_scale = jnp.asarray(scale_np).reshape(1, ACTION_DIM)

    packed = pack_params(params, action_scale, action_center, ACTION_DIM)
    action, log_prob = actor_forward(x, packed, eps, action_dim=ACTION_DIM)
    jax.block_until_ready((action, log_prob))

    # sanity check against pure-JAX reference (same bf16-matmul precision path)
    action_ref, logp_ref = actor_forward_ref(x, params, eps,
                                             action_scale, action_center)
    assert action.shape == (B, ACTION_DIM) and log_prob.shape == (B, 1)
    np.testing.assert_allclose(np.asarray(action), np.asarray(action_ref),
                               rtol=1e-3, atol=1e-3)
    np.testing.assert_allclose(np.asarray(log_prob), np.asarray(logp_ref),
                               rtol=1e-3, atol=1e-3)

    print("KERNEL_OK")
</pallas_src>

<mosaic_0001>
module attributes {stable_mosaic.version = 11 : i64} {
  func.func @actor_kernel(%arg0: i32, %arg1: memref<8x128xf32, #tpu.memory_space<vmem>>, %arg2: memref<128x256xbf16, #tpu.memory_space<vmem>>, %arg3: memref<256x256xbf16, #tpu.memory_space<vmem>>, %arg4: memref<256x256xbf16, #tpu.memory_space<vmem>>, %arg5: memref<256x256xbf16, #tpu.memory_space<vmem>>, %arg6: memref<8x256xf32, #tpu.memory_space<vmem>>, %arg7: memref<8x2xf32, #tpu.memory_space<vmem>>, %arg8: memref<8x128xf32, #tpu.memory_space<vmem>>) attributes {dimension_semantics = [#tpu.dimension_semantics<parallel>], iteration_bounds = array<i64: 1>, scalar_prefetch = 0 : i64, scratch_operands = 0 : i64, tpu.core_type = #tpu.core_type<tc>, window_params = [{transform_indices = @transform_0, window_bounds = array<i64: 8, 128>}, {pipeline_mode = #tpu.pipeline_mode<synchronous>, transform_indices = @transform_1, window_bounds = array<i64: 128, 256>}, {pipeline_mode = #tpu.pipeline_mode<synchronous>, transform_indices = @transform_2, window_bounds = array<i64: 256, 256>}, {pipeline_mode = #tpu.pipeline_mode<synchronous>, transform_indices = @transform_3, window_bounds = array<i64: 256, 256>}, {pipeline_mode = #tpu.pipeline_mode<synchronous>, transform_indices = @transform_4, window_bounds = array<i64: 256, 256>}, {pipeline_mode = #tpu.pipeline_mode<synchronous>, transform_indices = @transform_5, window_bounds = array<i64: 8, 256>}, {transform_indices = @transform_6, window_bounds = array<i64: 8, 2>}, {transform_indices = @transform_7, window_bounds = array<i64: 8, 128>}]} {
    %c0 = arith.constant 0 : index
    %c0_0 = arith.constant 0 : index
    %0 = vector.load %arg6[%c0, %c0_0] : memref<8x256xf32, #tpu.memory_space<vmem>>, vector<8x256xf32>
    %1 = vector.extract_strided_slice %0 {offsets = [0, 0], sizes = [1, 256], strides = [1, 1]} : vector<8x256xf32> to vector<1x256xf32>
    %2 = vector.extract_strided_slice %0 {offsets = [1, 0], sizes = [1, 256], strides = [1, 1]} : vector<8x256xf32> to vector<1x256xf32>
    %3 = vector.extract_strided_slice %0 {offsets = [2, 0], sizes = [1, 256], strides = [1, 1]} : vector<8x256xf32> to vector<1x256xf32>
    %4 = vector.extract_strided_slice %0 {offsets = [3, 0], sizes = [1, 256], strides = [1, 1]} : vector<8x256xf32> to vector<1x256xf32>
    %5 = vector.extract_strided_slice %0 {offsets = [4, 0], sizes = [1, 2], strides = [1, 1]} : vector<8x256xf32> to vector<1x2xf32>
    %6 = vector.extract_strided_slice %0 {offsets = [4, 128], sizes = [1, 2], strides = [1, 1]} : vector<8x256xf32> to vector<1x2xf32>
    %c0_1 = arith.constant 0 : index
    %c0_2 = arith.constant 0 : index
    %7 = vector.load %arg1[%c0_1, %c0_2] : memref<8x128xf32, #tpu.memory_space<vmem>>, vector<8x128xf32>
    %8 = arith.truncf %7 : vector<8x128xf32> to vector<8x128xbf16>
    %c0_3 = arith.constant 0 : index
    %c0_4 = arith.constant 0 : index
    %9 = vector.load %arg2[%c0_3, %c0_4] : memref<128x256xbf16, #tpu.memory_space<vmem>>, vector<128x256xbf16>
    %cst = arith.constant dense<0.000000e+00> : vector<8x256xf32>
    %10 = tpu.matmul %8, %9, %cst {dimension_numbers = #tpu.dot_dimension_numbers<[1], [0], [0], [1], [0, 0, 1, 1], [], []>} : vector<8x128xbf16>, vector<128x256xbf16>, vector<8x256xf32> -> vector<8x256xf32>
    %11 = vector.broadcast %1 : vector<1x256xf32> to vector<8x256xf32>
    %12 = arith.addf %10, %11 : vector<8x256xf32>
    %cst_5 = arith.constant 5.000000e-01 : f32
    %13 = vector.broadcast %cst_5 : f32 to vector<8x256xf32>
    %14 = arith.mulf %13, %12 : vector<8x256xf32>
    %cst_6 = arith.constant 0.707106769 : f32
    %15 = vector.broadcast %cst_6 : f32 to vector<8x256xf32>
    %16 = arith.mulf %12, %15 : vector<8x256xf32>
    %17 = math.erf %16 : vector<8x256xf32>
    %cst_7 = arith.constant 1.000000e+00 : f32
    %18 = vector.broadcast %cst_7 : f32 to vector<8x256xf32>
    %19 = arith.addf %18, %17 : vector<8x256xf32>
    %20 = arith.mulf %14, %19 : vector<8x256xf32>
    %21 = arith.truncf %20 : vector<8x256xf32> to vector<8x256xbf16>
    %c0_8 = arith.constant 0 : index
    %c0_9 = arith.constant 0 : index
    %22 = vector.load %arg3[%c0_8, %c0_9] : memref<256x256xbf16, #tpu.memory_space<vmem>>, vector<256x256xbf16>
    %cst_10 = arith.constant dense<0.000000e+00> : vector<8x256xf32>
    %23 = tpu.matmul %21, %22, %cst_10 {dimension_numbers = #tpu.dot_dimension_numbers<[1], [0], [0], [1], [0, 0, 1, 1], [], []>} : vector<8x256xbf16>, vector<256x256xbf16>, vector<8x256xf32> -> vector<8x256xf32>
    %24 = vector.broadcast %2 : vector<1x256xf32> to vector<8x256xf32>
    %25 = arith.addf %23, %24 : vector<8x256xf32>
    %cst_11 = arith.constant 5.000000e-01 : f32
    %26 = vector.broadcast %cst_11 : f32 to vector<8x256xf32>
    %27 = arith.mulf %26, %25 : vector<8x256xf32>
    %cst_12 = arith.constant 0.707106769 : f32
    %28 = vector.broadcast %cst_12 : f32 to vector<8x256xf32>
    %29 = arith.mulf %25, %28 : vector<8x256xf32>
    %30 = math.erf %29 : vector<8x256xf32>
    %cst_13 = arith.constant 1.000000e+00 : f32
    %31 = vector.broadcast %cst_13 : f32 to vector<8x256xf32>
    %32 = arith.addf %31, %30 : vector<8x256xf32>
    %33 = arith.mulf %27, %32 : vector<8x256xf32>
    %34 = arith.truncf %33 : vector<8x256xf32> to vector<8x256xbf16>
    %c0_14 = arith.constant 0 : index
    %c0_15 = arith.constant 0 : index
    %35 = vector.load %arg4[%c0_14, %c0_15] : memref<256x256xbf16, #tpu.memory_space<vmem>>, vector<256x256xbf16>
    %cst_16 = arith.constant dense<0.000000e+00> : vector<8x256xf32>
    %36 = tpu.matmul %34, %35, %cst_16 {dimension_numbers = #tpu.dot_dimension_numbers<[1], [0], [0], [1], [0, 0, 1, 1], [], []>} : vector<8x256xbf16>, vector<256x256xbf16>, vector<8x256xf32> -> vector<8x256xf32>
    %37 = vector.broadcast %3 : vector<1x256xf32> to vector<8x256xf32>
    %38 = arith.addf %36, %37 : vector<8x256xf32>
    %cst_17 = arith.constant 5.000000e-01 : f32
    %39 = vector.broadcast %cst_17 : f32 to vector<8x256xf32>
    %40 = arith.mulf %39, %38 : vector<8x256xf32>
    %cst_18 = arith.constant 0.707106769 : f32
    %41 = vector.broadcast %cst_18 : f32 to vector<8x256xf32>
    %42 = arith.mulf %38, %41 : vector<8x256xf32>
    %43 = math.erf %42 : vector<8x256xf32>
    %cst_19 = arith.constant 1.000000e+00 : f32
    %44 = vector.broadcast %cst_19 : f32 to vector<8x256xf32>
    %45 = arith.addf %44, %43 : vector<8x256xf32>
    %46 = arith.mulf %40, %45 : vector<8x256xf32>
    %47 = arith.truncf %46 : vector<8x256xf32> to vector<8x256xbf16>
    %c0_20 = arith.constant 0 : index
    %c0_21 = arith.constant 0 : index
    %48 = vector.load %arg5[%c0_20, %c0_21] : memref<256x256xbf16, #tpu.memory_space<vmem>>, vector<256x256xbf16>
    %cst_22 = arith.constant dense<0.000000e+00> : vector<8x256xf32>
    %49 = tpu.matmul %47, %48, %cst_22 {dimension_numbers = #tpu.dot_dimension_numbers<[1], [0], [0], [1], [0, 0, 1, 1], [], []>} : vector<8x256xbf16>, vector<256x256xbf16>, vector<8x256xf32> -> vector<8x256xf32>
    %50 = vector.broadcast %4 : vector<1x256xf32> to vector<8x256xf32>
    %51 = arith.addf %49, %50 : vector<8x256xf32>
    %52 = vector.extract_strided_slice %51 {offsets = [0, 0], sizes = [8, 2], strides = [1, 1]} : vector<8x256xf32> to vector<8x2xf32>
    %53 = vector.extract_strided_slice %51 {offsets = [0, 128], sizes = [8, 2], strides = [1, 1]} : vector<8x256xf32> to vector<8x2xf32>
    %cst_23 = arith.constant -2.000000e+01 : f32
    %cst_24 = arith.constant 2.000000e+00 : f32
    %54 = vector.broadcast %cst_23 : f32 to vector<8x2xf32>
    %55 = arith.maximumf %54, %53 : vector<8x2xf32>
    %56 = vector.broadcast %cst_24 : f32 to vector<8x2xf32>
    %57 = arith.minimumf %56, %55 : vector<8x2xf32>
    %58 = math.exp %57 : vector<8x2xf32>
    %c0_25 = arith.constant 0 : index
    %c0_26 = arith.constant 0 : index
    %59 = vector.load %arg7[%c0_25, %c0_26] : memref<8x2xf32, #tpu.memory_space<vmem>>, vector<8x2xf32>
    %60 = arith.mulf %58, %59 : vector<8x2xf32>
    %61 = arith.addf %52, %60 : vector<8x2xf32>
    %62 = math.tanh %61 : vector<8x2xf32>
    %63 = vector.broadcast %5 : vector<1x2xf32> to vector<8x2xf32>
    %64 = arith.mulf %62, %63 : vector<8x2xf32>
    %65 = vector.broadcast %6 : vector<1x2xf32> to vector<8x2xf32>
    %66 = arith.addf %64, %65 : vector<8x2xf32>
    %cst_27 = arith.constant -5.000000e-01 : f32
    %67 = vector.broadcast %cst_27 : f32 to vector<8x2xf32>
    %68 = arith.mulf %67, %59 : vector<8x2xf32>
    %69 = arith.mulf %68, %59 : vector<8x2xf32>
    %70 = arith.subf %69, %57 : vector<8x2xf32>
    %cst_28 = arith.constant 5.000000e-01 : f32
    %cst_29 = arith.constant 1.83787704 : f32
    %71 = arith.mulf %cst_28, %cst_29 : f32
    %72 = vector.broadcast %71 : f32 to vector<8x2xf32>
    %73 = arith.subf %70, %72 : vector<8x2xf32>
    %74 = arith.mulf %62, %62 : vector<8x2xf32>
    %cst_30 = arith.constant 1.000000e+00 : f32
    %75 = vector.broadcast %cst_30 : f32 to vector<8x2xf32>
    %76 = arith.subf %75, %74 : vector<8x2xf32>
    %77 = vector.broadcast %5 : vector<1x2xf32> to vector<8x2xf32>
    %78 = arith.mulf %77, %76 : vector<8x2xf32>
    %cst_31 = arith.constant 9.99999997E-7 : f32
    %79 = vector.broadcast %cst_31 : f32 to vector<8x2xf32>
    %80 = arith.addf %78, %79 : vector<8x2xf32>
    %81 = math.log %80 : vector<8x2xf32>
    %82 = arith.subf %73, %81 : vector<8x2xf32>
    %cst_32 = arith.constant dense<0.000000e+00> : vector<8xf32>
    %83 = vector.multi_reduction <add>, %82, %cst_32 [1] : vector<8x2xf32> to vector<8xf32>
    %84 = vector.shape_cast %83 : vector<8xf32> to vector<8x1xf32>
    %c0_33 = arith.constant 0 : index
    %c0_34 = arith.constant 0 : index
    %85 = vector.load %arg8[%c0_33, %c0_34] : memref<8x128xf32, #tpu.memory_space<vmem>>, vector<8x2xf32>
    tpu.vector_store %arg8[%c0_33, %c0_34], %66 {strides = array<i32>} : memref<8x128xf32, #tpu.memory_space<vmem>>, vector<8x2xf32>,
    %c0_35 = arith.constant 0 : index
    %c127 = arith.constant 127 : index
    %86 = vector.load %arg8[%c0_35, %c127] : memref<8x128xf32, #tpu.memory_space<vmem>>, vector<8x1xf32>
    tpu.vector_store %arg8[%c0_35, %c127], %84 {strides = array<i32>} : memref<8x128xf32, #tpu.memory_space<vmem>>, vector<8x1xf32>,
    return
  }
  func.func @transform_0(%arg0: i32) -> (i32, i32) {
    %c0_i32 = arith.constant 0 : i32
    %c0_i32_0 = arith.constant 0 : i32
    return %arg0, %c0_i32 : i32, i32
  }
  func.func @transform_1(%arg0: i32) -> (i32, i32) {
    %c0_i32 = arith.constant 0 : i32
    %c0_i32_0 = arith.constant 0 : i32
    %c0_i32_1 = arith.constant 0 : i32
    return %c0_i32, %c0_i32_0 : i32, i32
  }
  func.func @transform_2(%arg0: i32) -> (i32, i32) {
    %c0_i32 = arith.constant 0 : i32
    %c0_i32_0 = arith.constant 0 : i32
    %c0_i32_1 = arith.constant 0 : i32
    return %c0_i32, %c0_i32_0 : i32, i32
  }
  func.func @transform_3(%arg0: i32) -> (i32, i32) {
    %c0_i32 = arith.constant 0 : i32
    %c0_i32_0 = arith.constant 0 : i32
    %c0_i32_1 = arith.constant 0 : i32
    return %c0_i32, %c0_i32_0 : i32, i32
  }
  func.func @transform_4(%arg0: i32) -> (i32, i32) {
    %c0_i32 = arith.constant 0 : i32
    %c0_i32_0 = arith.constant 0 : i32
    %c0_i32_1 = arith.constant 0 : i32
    return %c0_i32, %c0_i32_0 : i32, i32
  }
  func.func @transform_5(%arg0: i32) -> (i32, i32) {
    %c0_i32 = arith.constant 0 : i32
    %c0_i32_0 = arith.constant 0 : i32
    %c0_i32_1 = arith.constant 0 : i32
    return %c0_i32, %c0_i32_0 : i32, i32
  }
  func.func @transform_6(%arg0: i32) -> (i32, i32) {
    %c0_i32 = arith.constant 0 : i32
    %c0_i32_0 = arith.constant 0 : i32
    return %arg0, %c0_i32 : i32, i32
  }
  func.func @transform_7(%arg0: i32) -> (i32, i32) {
    %c0_i32 = arith.constant 0 : i32
    %c0_i32_0 = arith.constant 0 : i32
    return %arg0, %c0_i32 : i32, i32
  }
}

</mosaic_0001>

<llo_original>
// kernel: actor_forward.1
$region0: #{actor_forward.1}
  #allocation0 [shape = 'u32[]', space=smem, size = 0x4, offset = 0x4, fixed_abs, tag = 'smem constant byte address 0x4 - core index']
  #allocation1 [shape = 'u32[72,128]{1,0:T(1,128)}', space=vmem, size = 0x9000, scoped, tag = 'internal scratch']
  %s0 = inlined_call_operand.vmem [shape: f32[8,128], index: 0, kind: input, shape index: {}]
  %s1 = inlined_call_operand.hbm [shape: bf16[128,256], index: 1, kind: input, shape index: {}]
  %s2 = inlined_call_operand.hbm [shape: bf16[256,256], index: 2, kind: input, shape index: {}]
  %s3 = inlined_call_operand.hbm [shape: bf16[256,256], index: 3, kind: input, shape index: {}]
  %s4 = inlined_call_operand.hbm [shape: bf16[256,256], index: 4, kind: input, shape index: {}]
  %s5 = inlined_call_operand.hbm [shape: f32[8,256], index: 5, kind: input, shape index: {}]
  %s6 = inlined_call_operand.vmem [shape: f32[8,2], index: 6, kind: input, shape index: {}]
  %s7 = inlined_call_operand.vmem [shape: f32[8,128], index: 7, kind: output, shape index: {}]
  %s8 = sld [smem:[#allocation0]]
  $region58: #{actor_forward.1} parent=0
    _
  %s10 = ssub.s32 1, %s8
  %s11 = scalar_select 0, %s10, %s8
  $region1: #{actor_forward.1} parent=0
    #allocation2 [shape = 'u8[65536]{0}', space=vmem, size = 0x10000, scoped, tag = 'input window, operand 1, single buffered']
    #allocation3 [shape = 's32[1]{0}', space=sflag, size = 0x4, scoped, tag = 'scoped memory for actor_forward.1']
    #allocation4 [shape = 'u8[131072]{0}', space=vmem, size = 0x20000, scoped, tag = 'input window, operand 2, single buffered']
    #allocation5 [shape = 's32[1]{0}', space=sflag, size = 0x4, scoped, tag = 'scoped memory for actor_forward.1']
    #allocation6 [shape = 'u8[131072]{0}', space=vmem, size = 0x20000, scoped, tag = 'input window, operand 3, single buffered']
    #allocation7 [shape = 'u8[131072]{0}', space=vmem, size = 0x20000, scoped, tag = 'input window, operand 4, single buffered']
    #allocation8 [shape = 's32[1]{0}', space=sflag, size = 0x4, scoped, tag = 'scoped memory for actor_forward.1']
    #allocation9 [shape = 'u8[8192]{0}', space=vmem, size = 0x2000, scoped, tag = 'input window, operand 5, single buffered']
    %12 = vsyncpa [#allocation3], 0
    %13 = vsyncpa [#allocation5], 0
    %14 = vsyncpa [#allocation8], 0
    // Predicated region
    $region2: #{actor_forward.1} parent=1 // pred_check
      _
    $region3: #{actor_forward.1} parent=1 // pred_check_branch
      %16 = sbr.rel (0) target = $region5
    $region4: #{actor_forward.1} parent=1 // pred_region
      _
    $region5: #{actor_forward.1} parent=1 // pred_fallthru
      _
    // Predicated region
    $region6: #{actor_forward.1} parent=1 // pred_check
      _
    $region7: #{actor_forward.1} parent=1 // pred_check_branch
      %18 = sbr.rel (0) target = $region9
    $region8: #{actor_forward.1} parent=1 // pred_region
      %20 = vsyncadd [#allocation3], 0
      %s21 = sshll.u32 %s1, 4
      %s22 = int_to_ptr.hbm [resolvable:$true] %s21
      %s23 = sshll.u32 [#allocation2], 4
      %s24 = int_to_ptr.vmem [resolvable:$true] %s23
      %29 = dma.hbm_to_vmem [thread:$0]  %s22, 2048, %s24, [#allocation3], 128, 128, 8
    $region9: #{actor_forward.1} parent=1 // pred_fallthru
      _
    // Predicated region
    $region10: #{actor_forward.1} parent=1 // pred_check
      _
    $region11: #{actor_forward.1} parent=1 // pred_check_branch
      %31 = sbr.rel (0) target = $region13
    $region12: #{actor_forward.1} parent=1 // pred_region
      %33 = vsyncadd [#allocation5], 0
      %s34 = sshll.u32 %s2, 4
      %s35 = int_to_ptr.hbm [resolvable:$true] %s34
      %s36 = sshll.u32 [#allocation4], 4
      %s37 = int_to_ptr.vmem [resolvable:$true] %s36
      %42 = dma.hbm_to_vmem [thread:$0]  %s35, 4096, %s37, [#allocation5], 128, 128, 8
    $region13: #{actor_forward.1} parent=1 // pred_fallthru
      _
    // Predicated region
    $region14: #{actor_forward.1} parent=1 // pred_check
      _
    $region15: #{actor_forward.1} parent=1 // pred_check_branch
      %44 = sbr.rel (0) target = $region17
    $region16: #{actor_forward.1} parent=1 // pred_region
      %46 = vsyncadd [#allocation5], 0
      %s47 = sshll.u32 %s3, 4
      %s48 = int_to_ptr.hbm [resolvable:$true] %s47
      %s49 = sshll.u32 [#allocation6], 4
      %s50 = int_to_ptr.vmem [resolvable:$true] %s49
      %55 = dma.hbm_to_vmem [thread:$0]  %s48, 4096, %s50, [#allocation5], 128, 128, 8
    $region17: #{actor_forward.1} parent=1 // pred_fallthru
      _
    // Predicated region
    $region18: #{actor_forward.1} parent=1 // pred_check
      _
    $region19: #{actor_forward.1} parent=1 // pred_check_branch
      %57 = sbr.rel (0) target = $region21
    $region20: #{actor_forward.1} parent=1 // pred_region
      %59 = vsyncadd [#allocation8], 0
      %s60 = sshll.u32 %s4, 4
      %s61 = int_to_ptr.hbm [resolvable:$true] %s60
      %s62 = sshll.u32 [#allocation7], 4
      %s63 = int_to_ptr.vmem [resolvable:$true] %s62
      %68 = dma.hbm_to_vmem [thread:$0]  %s61, 4096, %s63, [#allocation8], 128, 128, 8
    $region21: #{actor_forward.1} parent=1 // pred_fallthru
      _
    // Predicated region
    $region22: #{actor_forward.1} parent=1 // pred_check
      _
    $region23: #{actor_forward.1} parent=1 // pred_check_branch
      %70 = sbr.rel (0) target = $region25
    $region24: #{actor_forward.1} parent=1 // pred_region
      %72 = vsyncadd [#allocation8], 0
      %s74 = sshll.u32 %s5, 4
      %s75 = int_to_ptr.hbm [resolvable:$true] %s74
      %s76 = sshll.u32 [#allocation9], 4
      %s77 = int_to_ptr.vmem [resolvable:$true] %s76
      %79 = dma.hbm_to_vmem [thread:$0]  %s75, 256, %s77, [#allocation8]
    $region25: #{actor_forward.1} parent=1 // pred_fallthru
      _
    // Predicated region
    $region26: #{actor_forward.1} parent=1 // pred_check
      _
    $region27: #{actor_forward.1} parent=1 // pred_check_branch
      %81 = sbr.rel (0) target = $region29
    $region28: #{actor_forward.1} parent=1 // pred_region
      _
    $region29: #{actor_forward.1} parent=1 // pred_fallthru
      _
    // Predicated region
    $region30: #{actor_forward.1} parent=1 // pred_check
      _
    $region31: #{actor_forward.1} parent=1 // pred_check_branch
      %83 = sbr.rel (0) target = $region33
    $region32: #{actor_forward.1} parent=1 // pred_region
      %85 = dma.done [#allocation3], 2048
    $region33: #{actor_forward.1} parent=1 // pred_fallthru
      _
    // Predicated region
    $region34: #{actor_forward.1} parent=1 // pred_check
      _
    $region35: #{actor_forward.1} parent=1 // pred_check_branch
      %87 = sbr.rel (0) target = $region37
    $region36: #{actor_forward.1} parent=1 // pred_region
      %89 = dma.done [#allocation5], 4096
    $region37: #{actor_forward.1} parent=1 // pred_fallthru
      _
    // Predicated region
    $region38: #{actor_forward.1} parent=1 // pred_check
      _
    $region39: #{actor_forward.1} parent=1 // pred_check_branch
      %91 = sbr.rel (0) target = $region41
    $region40: #{actor_forward.1} parent=1 // pred_region
      %93 = dma.done [#allocation5], 4096
    $region41: #{actor_forward.1} parent=1 // pred_fallthru
      _
    // Predicated region
    $region42: #{actor_forward.1} parent=1 // pred_check
      _
    $region43: #{actor_forward.1} parent=1 // pred_check_branch
      %95 = sbr.rel (0) target = $region45
    $region44: #{actor_forward.1} parent=1 // pred_region
      %97 = dma.done [#allocation8], 4096
    $region45: #{actor_forward.1} parent=1 // pred_fallthru
      _
    // Predicated region
    $region46: #{actor_forward.1} parent=1 // pred_check
      _
    $region47: #{actor_forward.1} parent=1 // pred_check_branch
      %99 = sbr.rel (0) target = $region49
    $region48: #{actor_forward.1} parent=1 // pred_region
      %101 = dma.done [#allocation8], 256
    $region49: #{actor_forward.1} parent=1 // pred_fallthru
      _
    %v102 = vld [vmem:[#allocation9] sm:$0xff]
    %v103 = vld [vmem:[#allocation9 + $0x8] sm:$0xff]
    %v104 = vld [vmem:[%s0] sm:$0xff]
    %v105 = vpack.c.bf16 %v104, %v104
    %v106 = vld [vmem:[#allocation2] sm:$0xff]
    %v107 = vld [vmem:[#allocation2 + $0x8] sm:$0xff]
    %v108 = vld [vmem:[#allocation2 + $0x10] sm:$0xff]
    %v109 = vld [vmem:[#allocation2 + $0x18] sm:$0xff]
    %v110 = vld [vmem:[#allocation2 + $0x20] sm:$0xff]
    %v111 = vld [vmem:[#allocation2 + $0x28] sm:$0xff]
    %v112 = vld [vmem:[#allocation2 + $0x30] sm:$0xff]
    %v113 = vld [vmem:[#allocation2 + $0x38] sm:$0xff]
    %v114 = vld [vmem:[#allocation2 + $0x40] sm:$0xff]
    %v115 = vld [vmem:[#allocation2 + $0x48] sm:$0xff]
    %v116 = vld [vmem:[#allocation2 + $0x50] sm:$0xff]
    %v117 = vld [vmem:[#allocation2 + $0x58] sm:$0xff]
    %v118 = vld [vmem:[#allocation2 + $0x60] sm:$0xff]
    %v119 = vld [vmem:[#allocation2 + $0x68] sm:$0xff]
    %v120 = vld [vmem:[#allocation2 + $0x70] sm:$0xff]
    %v121 = vld [vmem:[#allocation2 + $0x78] sm:$0xff]
    %v122 = vperm.slane %v102, 0
    %v123 = vperm.slane %v103, 0
    %v140 = vunpack.c.l.b16 %v106
    %v141 = vunpack.c.h.b16 %v106
    %v142 = vunpack.c.l.b16 %v107
    %v143 = vunpack.c.h.b16 %v107
    %v144 = vunpack.c.l.b16 %v108
    %v145 = vunpack.c.h.b16 %v108
    %v146 = vunpack.c.l.b16 %v109
    %v147 = vunpack.c.h.b16 %v109
    %v148 = vunpack.c.l.b16 %v110
    %v149 = vunpack.c.h.b16 %v110
    %v150 = vunpack.c.l.b16 %v111
    %v151 = vunpack.c.h.b16 %v111
    %v152 = vunpack.c.l.b16 %v112
    %v153 = vunpack.c.h.b16 %v112
    %v154 = vunpack.c.l.b16 %v113
    %v155 = vunpack.c.h.b16 %v113
    %v156 = vunpack.c.l.b16 %v114
    %v157 = vunpack.c.h.b16 %v114
    %v158 = vunpack.c.l.b16 %v115
    %v159 = vunpack.c.h.b16 %v115
    %v160 = vunpack.c.l.b16 %v116
    %v161 = vunpack.c.h.b16 %v116
    %v162 = vunpack.c.l.b16 %v117
    %v163 = vunpack.c.h.b16 %v117
    %v164 = vunpack.c.l.b16 %v118
    %v165 = vunpack.c.h.b16 %v118
    %v166 = vunpack.c.l.b16 %v119
    %v167 = vunpack.c.h.b16 %v119
    %v168 = vunpack.c.l.b16 %v120
    %v169 = vunpack.c.h.b16 %v120
    %v170 = vunpack.c.l.b16 %v121
    %v171 = vunpack.c.h.b16 %v121
    %v172 = vpack.c.b16 %v142, %v140
    %v173 = vpack.c.b16 %v143, %v141
    %v174 = vpack.c.b16 %v146, %v144
    %v175 = vpack.c.b16 %v147, %v145
    %v176 = vpack.c.b16 %v150, %v148
    %v177 = vpack.c.b16 %v151, %v149
    %v178 = vpack.c.b16 %v154, %v152
    %v179 = vpack.c.b16 %v155, %v153
    %v180 = vpack.c.b16 %v158, %v156
    %v181 = vpack.c.b16 %v159, %v157
    %v182 = vpack.c.b16 %v162, %v160
    %v183 = vpack.c.b16 %v163, %v161
    %v184 = vpack.c.b16 %v166, %v164
    %v185 = vpack.c.b16 %v167, %v165
    %v186 = vpack.c.b16 %v170, %v168
    %v187 = vpack.c.b16 %v171, %v169
    %204 = vmatpush.bf16.msra.mxu0 %v186
    %205 = vmatpush.bf16.msra.mxu0 %v184
    %206 = vmatpush.bf16.msra.mxu0 %v182
    %207 = vmatpush.bf16.msra.mxu0 %v180
    %208 = vmatpush.bf16.msra.mxu0 %v178
    %209 = vmatpush.bf16.msra.mxu0 %v176
    %210 = vmatpush.bf16.msra.mxu0 %v174
    %211 = vmatpush.bf16.msra.mxu0 %v172
    %212 = vmatmul.bf16.gmra.mxu0 %v105
    %v213 = vpop.f32.mrf.mxu0
    %v214 = vadd.f32 %v122, %v213
    %v215 = vpop.f32.mrf.mxu0
    %216 = vdwg.mxu0
    %217 = vmatpush.bf16.msra.mxu0 %v187
    %218 = vmatpush.bf16.msra.mxu0 %v185
    %219 = vmatpush.bf16.msra.mxu0 %v183
    %220 = vmatpush.bf16.msra.mxu0 %v181
    %221 = vmatpush.bf16.msra.mxu0 %v179
    %222 = vmatpush.bf16.msra.mxu0 %v177
    %223 = vmatpush.bf16.msra.mxu0 %v175
    %224 = vmatpush.bf16.msra.mxu0 %v173
    %225 = vmatmul.bf16.gmra.mxu0 %v105
    %v226 = vpop.f32.mrf.mxu0
    %v227 = vadd.f32 %v123, %v226
    %v228 = vpop.f32.mrf.mxu0
    %229 = vdwg.mxu0
    %v230 = vmul.f32 %v214, 0.5
    %v231 = vmul.f32 %v227, 0.5
    %v232 = vmul.f32 %v214, 0.70710677
    %v233 = vmul.f32 %v227, 0.70710677
    %v234 = vmul.f32 %v232, %v232
    %v235 = vmin.f32 16.0, %v234
    %v236 = vmul.f32 %v235, 2.1237322e-06
    %v237 = vadd.f32 %v236, 0.00028619796
    %v238 = vmul.f32 %v235, %v237
    %v239 = vadd.f32 %v238, 0.0036580483
    %v240 = vmul.f32 %v235, %v239
    %v241 = vadd.f32 %v240, 0.05243302
    %v242 = vmul.f32 %v235, %v241
    %v243 = vadd.f32 %v242, 0.18741608
    %v244 = vmul.f32 %v235, %v243
    %v245 = vadd.f32 %v244, 1.1283791
    %v246 = vmul.f32 %v232, %v245
    %v247 = vmul.f32 %v235, 3.8918573e-05
    %v248 = vadd.f32 %v247, 0.001143296
    %v249 = vmul.f32 %v235, %v248
    %v250 = vadd.f32 %v249, 0.014752088
    %v251 = vmul.f32 %v235, %v250
    %v252 = vadd.f32 %v251, 0.112945676
    %v253 = vmul.f32 %v235, %v252
    %v254 = vadd.f32 %v253, 0.4994258
    %v255 = vmul.f32 %v235, %v254
    %v256 = vadd.f32 %v255, 1.0
    %v257 = vrcp.pop %v256
    %v258 = vmul.f32 %v256, %v257
    %v259 = vsub.f32 1.0, %v258
    %v260 = vmul.f32 %v257, %v259
    %v261 = vadd.f32 %v257, %v260
    %vm262 = vweird.f32 %v256
    %vm263 = vweird.f32 %v257
    %vm264 = vmor %vm262, %vm263
    %v265 = vsel %vm264, %v257, %v261
    %v266 = vand.u32 2147483647, %v256
    %vm267 = vcmp.eq.f32.partialorder %v266, 8.507059e+37
    %v268 = vand.u32 %v256, 2147483648
    %v269 = vor.u32 1.1754944e-38, %v268
    %v270 = vsel %vm267, %v269, %v265
    %v271 = vmul.f32 %v246, %v270
    %v272 = vmin.f32 %v271, 1.0
    %v273 = vmax.f32 %v272, -1.0
    %v274 = vmul.f32 %v233, %v233
    %v275 = vmin.f32 16.0, %v274
    %v276 = vmul.f32 %v275, 2.1237322e-06
    %v277 = vadd.f32 %v276, 0.00028619796
    %v278 = vmul.f32 %v275, %v277
    %v279 = vadd.f32 %v278, 0.0036580483
    %v280 = vmul.f32 %v275, %v279
    %v281 = vadd.f32 %v280, 0.05243302
    %v282 = vmul.f32 %v275, %v281
    %v283 = vadd.f32 %v282, 0.18741608
    %v284 = vmul.f32 %v275, %v283
    %v285 = vadd.f32 %v284, 1.1283791
    %v286 = vmul.f32 %v233, %v285
    %v287 = vmul.f32 %v275, 3.8918573e-05
    %v288 = vadd.f32 %v287, 0.001143296
    %v289 = vmul.f32 %v275, %v288
    %v290 = vadd.f32 %v289, 0.014752088
    %v291 = vmul.f32 %v275, %v290
    %v292 = vadd.f32 %v291, 0.112945676
    %v293 = vmul.f32 %v275, %v292
    %v294 = vadd.f32 %v293, 0.4994258
    %v295 = vmul.f32 %v275, %v294
    %v296 = vadd.f32 %v295, 1.0
    %v297 = vrcp.pop %v296
    %v298 = vmul.f32 %v296, %v297
    %v299 = vsub.f32 1.0, %v298
    %v300 = vmul.f32 %v297, %v299
    %v301 = vadd.f32 %v297, %v300
    %vm302 = vweird.f32 %v296
    %vm303 = vweird.f32 %v297
    %vm304 = vmor %vm302, %vm303
    %v305 = vsel %vm304, %v297, %v301
    %v306 = vand.u32 2147483647, %v296
    %vm307 = vcmp.eq.f32.partialorder %v306, 8.507059e+37
    %v308 = vand.u32 %v296, 2147483648
    %v309 = vor.u32 1.1754944e-38, %v308
    %v310 = vsel %vm307, %v309, %v305
    %v311 = vmul.f32 %v286, %v310
    %v312 = vmin.f32 %v311, 1.0
    %v313 = vmax.f32 %v312, -1.0
    %v314 = vadd.f32 %v273, 1.0
    %v315 = vadd.f32 %v313, 1.0
    %v316 = vmul.f32 %v230, %v314
    %v317 = vmul.f32 %v231, %v315
    %v318 = vpack.c.bf16 %v316, %v316
    %v319 = vpack.c.bf16 %v317, %v317
    %v320 = vld [vmem:[#allocation4] sm:$0xff]
    %v321 = vld [vmem:[#allocation4 + $0x8] sm:$0xff]
    %v322 = vld [vmem:[#allocation4 + $0x10] sm:$0xff]
    %v323 = vld [vmem:[#allocation4 + $0x18] sm:$0xff]
    %v324 = vld [vmem:[#allocation4 + $0x20] sm:$0xff]
    %v325 = vld [vmem:[#allocation4 + $0x28] sm:$0xff]
    %v326 = vld [vmem:[#allocation4 + $0x30] sm:$0xff]
    %v327 = vld [vmem:[#allocation4 + $0x38] sm:$0xff]
    %v328 = vld [vmem:[#allocation4 + $0x40] sm:$0xff]
    %v329 = vld [vmem:[#allocation4 + $0x48] sm:$0xff]
    %v330 = vld [vmem:[#allocation4 + $0x50] sm:$0xff]
    %v331 = vld [vmem:[#allocation4 + $0x58] sm:$0xff]
    %v332 = vld [vmem:[#allocation4 + $0x60] sm:$0xff]
    %v333 = vld [vmem:[#allocation4 + $0x68] sm:$0xff]
    %v334 = vld [vmem:[#allocation4 + $0x70] sm:$0xff]
    %v335 = vld [vmem:[#allocation4 + $0x78] sm:$0xff]
    %v336 = vld [vmem:[#allocation4 + $0x80] sm:$0xff]
    %v337 = vld [vmem:[#allocation4 + $0x88] sm:$0xff]
    %v338 = vld [vmem:[#allocation4 + $0x90] sm:$0xff]
    %v339 = vld [vmem:[#allocation4 + $0x98] sm:$0xff]
    %v340 = vld [vmem:[#allocation4 + $0xa0] sm:$0xff]
    %v341 = vld [vmem:[#allocation4 + $0xa8] sm:$0xff]
    %v342 = vld [vmem:[#allocation4 + $0xb0] sm:$0xff]
    %v343 = vld [vmem:[#allocation4 + $0xb8] sm:$0xff]
    %v344 = vld [vmem:[#allocation4 + $0xc0] sm:$0xff]
    %v345 = vld [vmem:[#allocation4 + $0xc8] sm:$0xff]
    %v346 = vld [vmem:[#allocation4 + $0xd0] sm:$0xff]
    %v347 = vld [vmem:[#allocation4 + $0xd8] sm:$0xff]
    %v348 = vld [vmem:[#allocation4 + $0xe0] sm:$0xff]
    %v349 = vld [vmem:[#allocation4 + $0xe8] sm:$0xff]
    %v350 = vld [vmem:[#allocation4 + $0xf0] sm:$0xff]
    %v351 = vld [vmem:[#allocation4 + $0xf8] sm:$0xff]
    %v352 = vperm.slane %v102, 1
    %v353 = vperm.slane %v103, 1
    %v386 = vunpack.c.l.b16 %v320
    %v387 = vunpack.c.h.b16 %v320
    %v388 = vunpack.c.l.b16 %v321
    %v389 = vunpack.c.h.b16 %v321
    %v390 = vunpack.c.l.b16 %v322
    %v391 = vunpack.c.h.b16 %v322
    %v392 = vunpack.c.l.b16 %v323
    %v393 = vunpack.c.h.b16 %v323
    %v394 = vunpack.c.l.b16 %v324
    %v395 = vunpack.c.h.b16 %v324
    %v396 = vunpack.c.l.b16 %v325
    %v397 = vunpack.c.h.b16 %v325
    %v398 = vunpack.c.l.b16 %v326
    %v399 = vunpack.c.h.b16 %v326
    %v400 = vunpack.c.l.b16 %v327
    %v401 = vunpack.c.h.b16 %v327
    %v402 = vunpack.c.l.b16 %v328
    %v403 = vunpack.c.h.b16 %v328
    %v404 = vunpack.c.l.b16 %v329
    %v405 = vunpack.c.h.b16 %v329
    %v406 = vunpack.c.l.b16 %v330
    %v407 = vunpack.c.h.b16 %v330
    %v408 = vunpack.c.l.b16 %v331
    %v409 = vunpack.c.h.b16 %v331
    %v410 = vunpack.c.l.b16 %v332
    %v411 = vunpack.c.h.b16 %v332
    %v412 = vunpack.c.l.b16 %v333
    %v413 = vunpack.c.h.b16 %v333
    %v414 = vunpack.c.l.b16 %v334
    %v415 = vunpack.c.h.b16 %v334
    %v416 = vunpack.c.l.b16 %v335
    %v417 = vunpack.c.h.b16 %v335
    %v418 = vunpack.c.l.b16 %v336
    %v419 = vunpack.c.h.b16 %v336
    %v420 = vunpack.c.l.b16 %v337
    %v421 = vunpack.c.h.b16 %v337
    %v422 = vunpack.c.l.b16 %v338
    %v423 = vunpack.c.h.b16 %v338
    %v424 = vunpack.c.l.b16 %v339
    %v425 = vunpack.c.h.b16 %v339
    %v426 = vunpack.c.l.b16 %v340
    %v427 = vunpack.c.h.b16 %v340
    %v428 = vunpack.c.l.b16 %v341
    %v429 = vunpack.c.h.b16 %v341
    %v430 = vunpack.c.l.b16 %v342
    %v431 = vunpack.c.h.b16 %v342
    %v432 = vunpack.c.l.b16 %v343
    %v433 = vunpack.c.h.b16 %v343
    %v434 = vunpack.c.l.b16 %v344
    %v435 = vunpack.c.h.b16 %v344
    %v436 = vunpack.c.l.b16 %v345
    %v437 = vunpack.c.h.b16 %v345
    %v438 = vunpack.c.l.b16 %v346
    %v439 = vunpack.c.h.b16 %v346
    %v440 = vunpack.c.l.b16 %v347
    %v441 = vunpack.c.h.b16 %v347
    %v442 = vunpack.c.l.b16 %v348
    %v443 = vunpack.c.h.b16 %v348
    %v444 = vunpack.c.l.b16 %v349
    %v445 = vunpack.c.h.b16 %v349
    %v446 = vunpack.c.l.b16 %v350
    %v447 = vunpack.c.h.b16 %v350
    %v448 = vunpack.c.l.b16 %v351
    %v449 = vunpack.c.h.b16 %v351
    %v450 = vpack.c.b16 %v388, %v386
    %v451 = vpack.c.b16 %v389, %v387
    %v452 = vpack.c.b16 %v392, %v390
    %v453 = vpack.c.b16 %v393, %v391
    %v454 = vpack.c.b16 %v396, %v394
    %v455 = vpack.c.b16 %v397, %v395
    %v456 = vpack.c.b16 %v400, %v398
    %v457 = vpack.c.b16 %v401, %v399
    %v458 = vpack.c.b16 %v404, %v402
    %v459 = vpack.c.b16 %v405, %v403
    %v460 = vpack.c.b16 %v408, %v406
    %v461 = vpack.c.b16 %v409, %v407
    %v462 = vpack.c.b16 %v412, %v410
    %v463 = vpack.c.b16 %v413, %v411
    %v464 = vpack.c.b16 %v416, %v414
    %v465 = vpack.c.b16 %v417, %v415
    %v466 = vpack.c.b16 %v420, %v418
    %v467 = vpack.c.b16 %v421, %v419
    %v468 = vpack.c.b16 %v424, %v422
    %v469 = vpack.c.b16 %v425, %v423
    %v470 = vpack.c.b16 %v428, %v426
    %v471 = vpack.c.b16 %v429, %v427
    %v472 = vpack.c.b16 %v432, %v430
    %v473 = vpack.c.b16 %v433, %v431
    %v474 = vpack.c.b16 %v436, %v434
    %v475 = vpack.c.b16 %v437, %v435
    %v476 = vpack.c.b16 %v440, %v438
    %v477 = vpack.c.b16 %v441, %v439
    %v478 = vpack.c.b16 %v444, %v442
    %v479 = vpack.c.b16 %v445, %v443
    %v480 = vpack.c.b16 %v448, %v446
    %v481 = vpack.c.b16 %v449, %v447
    %514 = vmatpush.bf16.msra.mxu0 %v464
    %515 = vmatpush.bf16.msra.mxu0 %v462
    %516 = vmatpush.bf16.msra.mxu0 %v460
    %517 = vmatpush.bf16.msra.mxu0 %v458
    %518 = vmatpush.bf16.msra.mxu0 %v456
    %519 = vmatpush.bf16.msra.mxu0 %v454
    %520 = vmatpush.bf16.msra.mxu0 %v452
    %521 = vmatpush.bf16.msra.mxu0 %v450
    %522 = vmatmul.bf16.gmra.mxu0 %v318
    %v523 = vpop.f32.mrf.mxu0
    %v524 = vadd.f32 %v352, %v523
    %v525 = vpop.f32.mrf.mxu0
    %526 = vdwg.mxu0
    %527 = vmatpush.bf16.msra.mxu0 %v480
    %528 = vmatpush.bf16.msra.mxu0 %v478
    %529 = vmatpush.bf16.msra.mxu0 %v476
    %530 = vmatpush.bf16.msra.mxu0 %v474
    %531 = vmatpush.bf16.msra.mxu0 %v472
    %532 = vmatpush.bf16.msra.mxu0 %v470
    %533 = vmatpush.bf16.msra.mxu0 %v468
    %534 = vmatpush.bf16.msra.mxu0 %v466
    %535 = vmatmul.bf16.gmra.mxu0 %v319
    %v536 = vpop.f32.mrf.mxu0
    %v537 = vadd.f32 %v524, %v536
    %v538 = vpop.f32.mrf.mxu0
    %539 = vdwg.mxu0
    %540 = vmatpush.bf16.msra.mxu0 %v465
    %541 = vmatpush.bf16.msra.mxu0 %v463
    %542 = vmatpush.bf16.msra.mxu0 %v461
    %543 = vmatpush.bf16.msra.mxu0 %v459
    %544 = vmatpush.bf16.msra.mxu0 %v457
    %545 = vmatpush.bf16.msra.mxu0 %v455
    %546 = vmatpush.bf16.msra.mxu0 %v453
    %547 = vmatpush.bf16.msra.mxu0 %v451
    %548 = vmatmul.bf16.gmra.mxu0 %v318
    %v549 = vpop.f32.mrf.mxu0
    %v550 = vadd.f32 %v353, %v549
    %v551 = vpop.f32.mrf.mxu0
    %552 = vdwg.mxu0
    %553 = vmatpush.bf16.msra.mxu0 %v481
    %554 = vmatpush.bf16.msra.mxu0 %v479
    %555 = vmatpush.bf16.msra.mxu0 %v477
    %556 = vmatpush.bf16.msra.mxu0 %v475
    %557 = vmatpush.bf16.msra.mxu0 %v473
    %558 = vmatpush.bf16.msra.mxu0 %v471
    %559 = vmatpush.bf16.msra.mxu0 %v469
    %560 = vmatpush.bf16.msra.mxu0 %v467
    %561 = vmatmul.bf16.gmra.mxu0 %v319
    %v562 = vpop.f32.mrf.mxu0
    %v563 = vadd.f32 %v550, %v562
    %v564 = vpop.f32.mrf.mxu0
    %565 = vdwg.mxu0
    %v566 = vmul.f32 %v537, 0.5
    %v567 = vmul.f32 %v563, 0.5
    %v568 = vmul.f32 %v537, 0.70710677
    %v569 = vmul.f32 %v563, 0.70710677
    %v570 = vmul.f32 %v568, %v568
    %v571 = vmin.f32 16.0, %v570
    %v572 = vmul.f32 %v571, 2.1237322e-06
    %v573 = vadd.f32 %v572, 0.00028619796
    %v574 = vmul.f32 %v571, %v573
    %v575 = vadd.f32 %v574, 0.0036580483
    %v576 = vmul.f32 %v571, %v575
    %v577 = vadd.f32 %v576, 0.05243302
    %v578 = vmul.f32 %v571, %v577
    %v579 = vadd.f32 %v578, 0.18741608
    %v580 = vmul.f32 %v571, %v579
    %v581 = vadd.f32 %v580, 1.1283791
    %v582 = vmul.f32 %v568, %v581
    %v583 = vmul.f32 %v571, 3.8918573e-05
    %v584 = vadd.f32 %v583, 0.001143296
    %v585 = vmul.f32 %v571, %v584
    %v586 = vadd.f32 %v585, 0.014752088
    %v587 = vmul.f32 %v571, %v586
    %v588 = vadd.f32 %v587, 0.112945676
    %v589 = vmul.f32 %v571, %v588
    %v590 = vadd.f32 %v589, 0.4994258
    %v591 = vmul.f32 %v571, %v590
    %v592 = vadd.f32 %v591, 1.0
    %v593 = vrcp.pop %v592
    %v594 = vmul.f32 %v592, %v593
    %v595 = vsub.f32 1.0, %v594
    %v596 = vmul.f32 %v593, %v595
    %v597 = vadd.f32 %v593, %v596
    %vm598 = vweird.f32 %v592
    %vm599 = vweird.f32 %v593
    %vm600 = vmor %vm598, %vm599
    %v601 = vsel %vm600, %v593, %v597
    %v602 = vand.u32 2147483647, %v592
    %vm603 = vcmp.eq.f32.partialorder %v602, 8.507059e+37
    %v604 = vand.u32 %v592, 2147483648
    %v605 = vor.u32 1.1754944e-38, %v604
    %v606 = vsel %vm603, %v605, %v601
    %v607 = vmul.f32 %v582, %v606
    %v608 = vmin.f32 %v607, 1.0
    %v609 = vmax.f32 %v608, -1.0
    %v610 = vmul.f32 %v569, %v569
    %v611 = vmin.f32 16.0, %v610
    %v612 = vmul.f32 %v611, 2.1237322e-06
    %v613 = vadd.f32 %v612, 0.00028619796
    %v614 = vmul.f32 %v611, %v613
    %v615 = vadd.f32 %v614, 0.0036580483
    %v616 = vmul.f32 %v611, %v615
    %v617 = vadd.f32 %v616, 0.05243302
    %v618 = vmul.f32 %v611, %v617
    %v619 = vadd.f32 %v618, 0.18741608
    %v620 = vmul.f32 %v611, %v619
    %v621 = vadd.f32 %v620, 1.1283791
    %v622 = vmul.f32 %v569, %v621
    %v623 = vmul.f32 %v611, 3.8918573e-05
    %v624 = vadd.f32 %v623, 0.001143296
    %v625 = vmul.f32 %v611, %v624
    %v626 = vadd.f32 %v625, 0.014752088
    %v627 = vmul.f32 %v611, %v626
    %v628 = vadd.f32 %v627, 0.112945676
    %v629 = vmul.f32 %v611, %v628
    %v630 = vadd.f32 %v629, 0.4994258
    %v631 = vmul.f32 %v611, %v630
    %v632 = vadd.f32 %v631, 1.0
    %v633 = vrcp.pop %v632
    %v634 = vmul.f32 %v632, %v633
    %v635 = vsub.f32 1.0, %v634
    %v636 = vmul.f32 %v633, %v635
    %v637 = vadd.f32 %v633, %v636
    %vm638 = vweird.f32 %v632
    %vm639 = vweird.f32 %v633
    %vm640 = vmor %vm638, %vm639
    %v641 = vsel %vm640, %v633, %v637
    %v642 = vand.u32 2147483647, %v632
    %vm643 = vcmp.eq.f32.partialorder %v642, 8.507059e+37
    %v644 = vand.u32 %v632, 2147483648
    %v645 = vor.u32 1.1754944e-38, %v644
    %v646 = vsel %vm643, %v645, %v641
    %v647 = vmul.f32 %v622, %v646
    %v648 = vmin.f32 %v647, 1.0
    %v649 = vmax.f32 %v648, -1.0
    %v650 = vadd.f32 %v609, 1.0
    %v651 = vadd.f32 %v649, 1.0
    %v652 = vmul.f32 %v566, %v650
    %v653 = vmul.f32 %v567, %v651
    %v654 = vpack.c.bf16 %v652, %v652
    %v655 = vpack.c.bf16 %v653, %v653
    %v656 = vld [vmem:[#allocation6] sm:$0xff]
    %v657 = vld [vmem:[#allocation6 + $0x8] sm:$0xff]
    %v658 = vld [vmem:[#allocation6 + $0x10] sm:$0xff]
    %v659 = vld [vmem:[#allocation6 + $0x18] sm:$0xff]
    %v660 = vld [vmem:[#allocation6 + $0x20] sm:$0xff]
    %v661 = vld [vmem:[#allocation6 + $0x28] sm:$0xff]
    %v662 = vld [vmem:[#allocation6 + $0x30] sm:$0xff]
    %v663 = vld [vmem:[#allocation6 + $0x38] sm:$0xff]
    %v664 = vld [vmem:[#allocation6 + $0x40] sm:$0xff]
    %v665 = vld [vmem:[#allocation6 + $0x48] sm:$0xff]
    %v666 = vld [vmem:[#allocation6 + $0x50] sm:$0xff]
    %v667 = vld [vmem:[#allocation6 + $0x58] sm:$0xff]
    %v668 = vld [vmem:[#allocation6 + $0x60] sm:$0xff]
    %v669 = vld [vmem:[#allocation6 + $0x68] sm:$0xff]
    %v670 = vld [vmem:[#allocation6 + $0x70] sm:$0xff]
    %v671 = vld [vmem:[#allocation6 + $0x78] sm:$0xff]
    %v672 = vld [vmem:[#allocation6 + $0x80] sm:$0xff]
    %v673 = vld [vmem:[#allocation6 + $0x88] sm:$0xff]
    %v674 = vld [vmem:[#allocation6 + $0x90] sm:$0xff]
    %v675 = vld [vmem:[#allocation6 + $0x98] sm:$0xff]
    %v676 = vld [vmem:[#allocation6 + $0xa0] sm:$0xff]
    %v677 = vld [vmem:[#allocation6 + $0xa8] sm:$0xff]
    %v678 = vld [vmem:[#allocation6 + $0xb0] sm:$0xff]
    %v679 = vld [vmem:[#allocation6 + $0xb8] sm:$0xff]
    %v680 = vld [vmem:[#allocation6 + $0xc0] sm:$0xff]
    %v681 = vld [vmem:[#allocation6 + $0xc8] sm:$0xff]
    %v682 = vld [vmem:[#allocation6 + $0xd0] sm:$0xff]
    %v683 = vld [vmem:[#allocation6 + $0xd8] sm:$0xff]
    %v684 = vld [vmem:[#allocation6 + $0xe0] sm:$0xff]
    %v685 = vld [vmem:[#allocation6 + $0xe8] sm:$0xff]
    %v686 = vld [vmem:[#allocation6 + $0xf0] sm:$0xff]
    %v687 = vld [vmem:[#allocation6 + $0xf8] sm:$0xff]
    %v688 = vperm.slane %v102, 2
    %v689 = vperm.slane %v103, 2
    %v722 = vunpack.c.l.b16 %v656
    %v723 = vunpack.c.h.b16 %v656
    %v724 = vunpack.c.l.b16 %v657
    %v725 = vunpack.c.h.b16 %v657
    %v726 = vunpack.c.l.b16 %v658
    %v727 = vunpack.c.h.b16 %v658
    %v728 = vunpack.c.l.b16 %v659
    %v729 = vunpack.c.h.b16 %v659
    %v730 = vunpack.c.l.b16 %v660
    %v731 = vunpack.c.h.b16 %v660
    %v732 = vunpack.c.l.b16 %v661
    %v733 = vunpack.c.h.b16 %v661
    %v734 = vunpack.c.l.b16 %v662
    %v735 = vunpack.c.h.b16 %v662
    %v736 = vunpack.c.l.b16 %v663
    %v737 = vunpack.c.h.b16 %v663
    %v738 = vunpack.c.l.b16 %v664
    %v739 = vunpack.c.h.b16 %v664
    %v740 = vunpack.c.l.b16 %v665
    %v741 = vunpack.c.h.b16 %v665
    %v742 = vunpack.c.l.b16 %v666
    %v743 = vunpack.c.h.b16 %v666
    %v744 = vunpack.c.l.b16 %v667
    %v745 = vunpack.c.h.b16 %v667
    %v746 = vunpack.c.l.b16 %v668
    %v747 = vunpack.c.h.b16 %v668
    %v748 = vunpack.c.l.b16 %v669
    %v749 = vunpack.c.h.b16 %v669
    %v750 = vunpack.c.l.b16 %v670
    %v751 = vunpack.c.h.b16 %v670
    %v752 = vunpack.c.l.b16 %v671
    %v753 = vunpack.c.h.b16 %v671
    %v754 = vunpack.c.l.b16 %v672
    %v755 = vunpack.c.h.b16 %v672
    %v756 = vunpack.c.l.b16 %v673
    %v757 = vunpack.c.h.b16 %v673
    %v758 = vunpack.c.l.b16 %v674
    %v759 = vunpack.c.h.b16 %v674
    %v760 = vunpack.c.l.b16 %v675
    %v761 = vunpack.c.h.b16 %v675
    %v762 = vunpack.c.l.b16 %v676
    %v763 = vunpack.c.h.b16 %v676
    %v764 = vunpack.c.l.b16 %v677
    %v765 = vunpack.c.h.b16 %v677
    %v766 = vunpack.c.l.b16 %v678
    %v767 = vunpack.c.h.b16 %v678
    %v768 = vunpack.c.l.b16 %v679
    %v769 = vunpack.c.h.b16 %v679
    %v770 = vunpack.c.l.b16 %v680
    %v771 = vunpack.c.h.b16 %v680
    %v772 = vunpack.c.l.b16 %v681
    %v773 = vunpack.c.h.b16 %v681
    %v774 = vunpack.c.l.b16 %v682
    %v775 = vunpack.c.h.b16 %v682
    %v776 = vunpack.c.l.b16 %v683
    %v777 = vunpack.c.h.b16 %v683
    %v778 = vunpack.c.l.b16 %v684
    %v779 = vunpack.c.h.b16 %v684
    %v780 = vunpack.c.l.b16 %v685
    %v781 = vunpack.c.h.b16 %v685
    %v782 = vunpack.c.l.b16 %v686
    %v783 = vunpack.c.h.b16 %v686
    %v784 = vunpack.c.l.b16 %v687
    %v785 = vunpack.c.h.b16 %v687
    %v786 = vpack.c.b16 %v724, %v722
    %v787 = vpack.c.b16 %v725, %v723
    %v788 = vpack.c.b16 %v728, %v726
    %v789 = vpack.c.b16 %v729, %v727
    %v790 = vpack.c.b16 %v732, %v730
    %v791 = vpack.c.b16 %v733, %v731
    %v792 = vpack.c.b16 %v736, %v734
    %v793 = vpack.c.b16 %v737, %v735
    %v794 = vpack.c.b16 %v740, %v738
    %v795 = vpack.c.b16 %v741, %v739
    %v796 = vpack.c.b16 %v744, %v742
    %v797 = vpack.c.b16 %v745, %v743
    %v798 = vpack.c.b16 %v748, %v746
    %v799 = vpack.c.b16 %v749, %v747
    %v800 = vpack.c.b16 %v752, %v750
    %v801 = vpack.c.b16 %v753, %v751
    %v802 = vpack.c.b16 %v756, %v754
    %v803 = vpack.c.b16 %v757, %v755
    %v804 = vpack.c.b16 %v760, %v758
    %v805 = vpack.c.b16 %v761, %v759
    %v806 = vpack.c.b16 %v764, %v762
    %v807 = vpack.c.b16 %v765, %v763
    %v808 = vpack.c.b16 %v768, %v766
    %v809 = vpack.c.b16 %v769, %v767
    %v810 = vpack.c.b16 %v772, %v770
    %v811 = vpack.c.b16 %v773, %v771
    %v812 = vpack.c.b16 %v776, %v774
    %v813 = vpack.c.b16 %v777, %v775
    %v814 = vpack.c.b16 %v780, %v778
    %v815 = vpack.c.b16 %v781, %v779
    %v816 = vpack.c.b16 %v784, %v782
    %v817 = vpack.c.b16 %v785, %v783
    %850 = vmatpush.bf16.msra.mxu0 %v800
    %851 = vmatpush.bf16.msra.mxu0 %v798
    %852 = vmatpush.bf16.msra.mxu0 %v796
    %853 = vmatpush.bf16.msra.mxu0 %v794
    %854 = vmatpush.bf16.msra.mxu0 %v792
    %855 = vmatpush.bf16.msra.mxu0 %v790
    %856 = vmatpush.bf16.msra.mxu0 %v788
    %857 = vmatpush.bf16.msra.mxu0 %v786
    %858 = vmatmul.bf16.gmra.mxu0 %v654
    %v859 = vpop.f32.mrf.mxu0
    %v860 = vadd.f32 %v688, %v859
    %v861 = vpop.f32.mrf.mxu0
    %862 = vdwg.mxu0
    %863 = vmatpush.bf16.msra.mxu0 %v816
    %864 = vmatpush.bf16.msra.mxu0 %v814
    %865 = vmatpush.bf16.msra.mxu0 %v812
    %866 = vmatpush.bf16.msra.mxu0 %v810
    %867 = vmatpush.bf16.msra.mxu0 %v808
    %868 = vmatpush.bf16.msra.mxu0 %v806
    %869 = vmatpush.bf16.msra.mxu0 %v804
    %870 = vmatpush.bf16.msra.mxu0 %v802
    %871 = vmatmul.bf16.gmra.mxu0 %v655
    %v872 = vpop.f32.mrf.mxu0
    %v873 = vadd.f32 %v860, %v872
    %v874 = vpop.f32.mrf.mxu0
    %875 = vdwg.mxu0
    %876 = vmatpush.bf16.msra.mxu0 %v801
    %877 = vmatpush.bf16.msra.mxu0 %v799
    %878 = vmatpush.bf16.msra.mxu0 %v797
    %879 = vmatpush.bf16.msra.mxu0 %v795
    %880 = vmatpush.bf16.msra.mxu0 %v793
    %881 = vmatpush.bf16.msra.mxu0 %v791
    %882 = vmatpush.bf16.msra.mxu0 %v789
    %883 = vmatpush.bf16.msra.mxu0 %v787
    %884 = vmatmul.bf16.gmra.mxu0 %v654
    %v885 = vpop.f32.mrf.mxu0
    %v886 = vadd.f32 %v689, %v885
    %v887 = vpop.f32.mrf.mxu0
    %888 = vdwg.mxu0
    %889 = vmatpush.bf16.msra.mxu0 %v817
    %890 = vmatpush.bf16.msra.mxu0 %v815
    %891 = vmatpush.bf16.msra.mxu0 %v813
    %892 = vmatpush.bf16.msra.mxu0 %v811
    %893 = vmatpush.bf16.msra.mxu0 %v809
    %894 = vmatpush.bf16.msra.mxu0 %v807
    %895 = vmatpush.bf16.msra.mxu0 %v805
    %896 = vmatpush.bf16.msra.mxu0 %v803
    %897 = vmatmul.bf16.gmra.mxu0 %v655
    %v898 = vpop.f32.mrf.mxu0
    %v899 = vadd.f32 %v886, %v898
    %v900 = vpop.f32.mrf.mxu0
    %901 = vdwg.mxu0
    %v902 = vmul.f32 %v873, 0.5
    %v903 = vmul.f32 %v899, 0.5
    %v904 = vmul.f32 %v873, 0.70710677
    %v905 = vmul.f32 %v899, 0.70710677
    %v906 = vmul.f32 %v904, %v904
    %v907 = vmin.f32 16.0, %v906
    %v908 = vmul.f32 %v907, 2.1237322e-06
    %v909 = vadd.f32 %v908, 0.00028619796
    %v910 = vmul.f32 %v907, %v909
    %v911 = vadd.f32 %v910, 0.0036580483
    %v912 = vmul.f32 %v907, %v911
    %v913 = vadd.f32 %v912, 0.05243302
    %v914 = vmul.f32 %v907, %v913
    %v915 = vadd.f32 %v914, 0.18741608
    %v916 = vmul.f32 %v907, %v915
    %v917 = vadd.f32 %v916, 1.1283791
    %v918 = vmul.f32 %v904, %v917
    %v919 = vmul.f32 %v907, 3.8918573e-05
    %v920 = vadd.f32 %v919, 0.001143296
    %v921 = vmul.f32 %v907, %v920
    %v922 = vadd.f32 %v921, 0.014752088
    %v923 = vmul.f32 %v907, %v922
    %v924 = vadd.f32 %v923, 0.112945676
    %v925 = vmul.f32 %v907, %v924
    %v926 = vadd.f32 %v925, 0.4994258
    %v927 = vmul.f32 %v907, %v926
    %v928 = vadd.f32 %v927, 1.0
    %v929 = vrcp.pop %v928
    %v930 = vmul.f32 %v928, %v929
    %v931 = vsub.f32 1.0, %v930
    %v932 = vmul.f32 %v929, %v931
    %v933 = vadd.f32 %v929, %v932
    %vm934 = vweird.f32 %v928
    %vm935 = vweird.f32 %v929
    %vm936 = vmor %vm934, %vm935
    %v937 = vsel %vm936, %v929, %v933
    %v938 = vand.u32 2147483647, %v928
    %vm939 = vcmp.eq.f32.partialorder %v938, 8.507059e+37
    %v940 = vand.u32 %v928, 2147483648
    %v941 = vor.u32 1.1754944e-38, %v940
    %v942 = vsel %vm939, %v941, %v937
    %v943 = vmul.f32 %v918, %v942
    %v944 = vmin.f32 %v943, 1.0
    %v945 = vmax.f32 %v944, -1.0
    %v946 = vmul.f32 %v905, %v905
    %v947 = vmin.f32 16.0, %v946
    %v948 = vmul.f32 %v947, 2.1237322e-06
    %v949 = vadd.f32 %v948, 0.00028619796
    %v950 = vmul.f32 %v947, %v949
    %v951 = vadd.f32 %v950, 0.0036580483
    %v952 = vmul.f32 %v947, %v951
    %v953 = vadd.f32 %v952, 0.05243302
    %v954 = vmul.f32 %v947, %v953
    %v955 = vadd.f32 %v954, 0.18741608
    %v956 = vmul.f32 %v947, %v955
    %v957 = vadd.f32 %v956, 1.1283791
    %v958 = vmul.f32 %v905, %v957
    %v959 = vmul.f32 %v947, 3.8918573e-05
    %v960 = vadd.f32 %v959, 0.001143296
    %v961 = vmul.f32 %v947, %v960
    %v962 = vadd.f32 %v961, 0.014752088
    %v963 = vmul.f32 %v947, %v962
    %v964 = vadd.f32 %v963, 0.112945676
    %v965 = vmul.f32 %v947, %v964
    %v966 = vadd.f32 %v965, 0.4994258
    %v967 = vmul.f32 %v947, %v966
    %v968 = vadd.f32 %v967, 1.0
    %v969 = vrcp.pop %v968
    %v970 = vmul.f32 %v968, %v969
    %v971 = vsub.f32 1.0, %v970
    %v972 = vmul.f32 %v969, %v971
    %v973 = vadd.f32 %v969, %v972
    %vm974 = vweird.f32 %v968
    %vm975 = vweird.f32 %v969
    %vm976 = vmor %vm974, %vm975
    %v977 = vsel %vm976, %v969, %v973
    %v978 = vand.u32 2147483647, %v968
    %vm979 = vcmp.eq.f32.partialorder %v978, 8.507059e+37
    %v980 = vand.u32 %v968, 2147483648
    %v981 = vor.u32 1.1754944e-38, %v980
    %v982 = vsel %vm979, %v981, %v977
    %v983 = vmul.f32 %v958, %v982
    %v984 = vmin.f32 %v983, 1.0
    %v985 = vmax.f32 %v984, -1.0
    %v986 = vadd.f32 %v945, 1.0
    %v987 = vadd.f32 %v985, 1.0
    %v988 = vmul.f32 %v902, %v986
    %v989 = vmul.f32 %v903, %v987
    %v990 = vpack.c.bf16 %v988, %v988
    %v991 = vpack.c.bf16 %v989, %v989
    %v992 = vld [vmem:[#allocation7] sm:$0xff]
    %v993 = vld [vmem:[#allocation7 + $0x8] sm:$0xff]
    %v994 = vld [vmem:[#allocation7 + $0x10] sm:$0xff]
    %v995 = vld [vmem:[#allocation7 + $0x18] sm:$0xff]
    %v996 = vld [vmem:[#allocation7 + $0x20] sm:$0xff]
    %v997 = vld [vmem:[#allocation7 + $0x28] sm:$0xff]
    %v998 = vld [vmem:[#allocation7 + $0x30] sm:$0xff]
    %v999 = vld [vmem:[#allocation7 + $0x38] sm:$0xff]
    %v1000 = vld [vmem:[#allocation7 + $0x40] sm:$0xff]
    %v1001 = vld [vmem:[#allocation7 + $0x48] sm:$0xff]
    %v1002 = vld [vmem:[#allocation7 + $0x50] sm:$0xff]
    %v1003 = vld [vmem:[#allocation7 + $0x58] sm:$0xff]
    %v1004 = vld [vmem:[#allocation7 + $0x60] sm:$0xff]
    %v1005 = vld [vmem:[#allocation7 + $0x68] sm:$0xff]
    %v1006 = vld [vmem:[#allocation7 + $0x70] sm:$0xff]
    %v1007 = vld [vmem:[#allocation7 + $0x78] sm:$0xff]
    %v1008 = vld [vmem:[#allocation7 + $0x80] sm:$0xff]
    %v1009 = vld [vmem:[#allocation7 + $0x88] sm:$0xff]
    %v1010 = vld [vmem:[#allocation7 + $0x90] sm:$0xff]
    %v1011 = vld [vmem:[#allocation7 + $0x98] sm:$0xff]
    %v1012 = vld [vmem:[#allocation7 + $0xa0] sm:$0xff]
    %v1013 = vld [vmem:[#allocation7 + $0xa8] sm:$0xff]
    %v1014 = vld [vmem:[#allocation7 + $0xb0] sm:$0xff]
    %v1015 = vld [vmem:[#allocation7 + $0xb8] sm:$0xff]
    %v1016 = vld [vmem:[#allocation7 + $0xc0] sm:$0xff]
    %v1017 = vld [vmem:[#allocation7 + $0xc8] sm:$0xff]
    %v1018 = vld [vmem:[#allocation7 + $0xd0] sm:$0xff]
    %v1019 = vld [vmem:[#allocation7 + $0xd8] sm:$0xff]
    %v1020 = vld [vmem:[#allocation7 + $0xe0] sm:$0xff]
    %v1021 = vld [vmem:[#allocation7 + $0xe8] sm:$0xff]
    %v1022 = vld [vmem:[#allocation7 + $0xf0] sm:$0xff]
    %v1023 = vld [vmem:[#allocation7 + $0xf8] sm:$0xff]
    %v1024 = vperm.slane %v102, 3
    %v1025 = vperm.slane %v103, 3
    %v1058 = vunpack.c.l.b16 %v992
    %v1059 = vunpack.c.h.b16 %v992
    %v1060 = vunpack.c.l.b16 %v993
    %v1061 = vunpack.c.h.b16 %v993
    %v1062 = vunpack.c.l.b16 %v994
    %v1063 = vunpack.c.h.b16 %v994
    %v1064 = vunpack.c.l.b16 %v995
    %v1065 = vunpack.c.h.b16 %v995
    %v1066 = vunpack.c.l.b16 %v996
    %v1067 = vunpack.c.h.b16 %v996
    %v1068 = vunpack.c.l.b16 %v997
    %v1069 = vunpack.c.h.b16 %v997
    %v1070 = vunpack.c.l.b16 %v998
    %v1071 = vunpack.c.h.b16 %v998
    %v1072 = vunpack.c.l.b16 %v999
    %v1073 = vunpack.c.h.b16 %v999
    %v1074 = vunpack.c.l.b16 %v1000
    %v1075 = vunpack.c.h.b16 %v1000
    %v1076 = vunpack.c.l.b16 %v1001
    %v1077 = vunpack.c.h.b16 %v1001
    %v1078 = vunpack.c.l.b16 %v1002
    %v1079 = vunpack.c.h.b16 %v1002
    %v1080 = vunpack.c.l.b16 %v1003
    %v1081 = vunpack.c.h.b16 %v1003
    %v1082 = vunpack.c.l.b16 %v1004
    %v1083 = vunpack.c.h.b16 %v1004
    %v1084 = vunpack.c.l.b16 %v1005
    %v1085 = vunpack.c.h.b16 %v1005
    %v1086 = vunpack.c.l.b16 %v1006
    %v1087 = vunpack.c.h.b16 %v1006
    %v1088 = vunpack.c.l.b16 %v1007
    %v1089 = vunpack.c.h.b16 %v1007
    %v1090 = vunpack.c.l.b16 %v1008
    %v1091 = vunpack.c.h.b16 %v1008
    %v1092 = vunpack.c.l.b16 %v1009
    %v1093 = vunpack.c.h.b16 %v1009
    %v1094 = vunpack.c.l.b16 %v1010
    %v1095 = vunpack.c.h.b16 %v1010
    %v1096 = vunpack.c.l.b16 %v1011
    %v1097 = vunpack.c.h.b16 %v1011
    %v1098 = vunpack.c.l.b16 %v1012
    %v1099 = vunpack.c.h.b16 %v1012
    %v1100 = vunpack.c.l.b16 %v1013
    %v1101 = vunpack.c.h.b16 %v1013
    %v1102 = vunpack.c.l.b16 %v1014
    %v1103 = vunpack.c.h.b16 %v1014
    %v1104 = vunpack.c.l.b16 %v1015
    %v1105 = vunpack.c.h.b16 %v1015
    %v1106 = vunpack.c.l.b16 %v1016
    %v1107 = vunpack.c.h.b16 %v1016
    %v1108 = vunpack.c.l.b16 %v1017
    %v1109 = vunpack.c.h.b16 %v1017
    %v1110 = vunpack.c.l.b16 %v1018
    %v1111 = vunpack.c.h.b16 %v1018
    %v1112 = vunpack.c.l.b16 %v1019
    %v1113 = vunpack.c.h.b16 %v1019
    %v1114 = vunpack.c.l.b16 %v1020
    %v1115 = vunpack.c.h.b16 %v1020
    %v1116 = vunpack.c.l.b16 %v1021
    %v1117 = vunpack.c.h.b16 %v1021
    %v1118 = vunpack.c.l.b16 %v1022
    %v1119 = vunpack.c.h.b16 %v1022
    %v1120 = vunpack.c.l.b16 %v1023
    %v1121 = vunpack.c.h.b16 %v1023
    %v1122 = vpack.c.b16 %v1060, %v1058
    %v1123 = vpack.c.b16 %v1061, %v1059
    %v1124 = vpack.c.b16 %v1064, %v1062
    %v1125 = vpack.c.b16 %v1065, %v1063
    %v1126 = vpack.c.b16 %v1068, %v1066
    %v1127 = vpack.c.b16 %v1069, %v1067
    %v1128 = vpack.c.b16 %v1072, %v1070
    %v1129 = vpack.c.b16 %v1073, %v1071
    %v1130 = vpack.c.b16 %v1076, %v1074
    %v1131 = vpack.c.b16 %v1077, %v1075
    %v1132 = vpack.c.b16 %v1080, %v1078
    %v1133 = vpack.c.b16 %v1081, %v1079
    %v1134 = vpack.c.b16 %v1084, %v1082
    %v1135 = vpack.c.b16 %v1085, %v1083
    %v1136 = vpack.c.b16 %v1088, %v1086
    %v1137 = vpack.c.b16 %v1089, %v1087
    %v1138 = vpack.c.b16 %v1092, %v1090
    %v1139 = vpack.c.b16 %v1093, %v1091
    %v1140 = vpack.c.b16 %v1096, %v1094
    %v1141 = vpack.c.b16 %v1097, %v1095
    %v1142 = vpack.c.b16 %v1100, %v1098
    %v1143 = vpack.c.b16 %v1101, %v1099
    %v1144 = vpack.c.b16 %v1104, %v1102
    %v1145 = vpack.c.b16 %v1105, %v1103
    %v1146 = vpack.c.b16 %v1108, %v1106
    %v1147 = vpack.c.b16 %v1109, %v1107
    %v1148 = vpack.c.b16 %v1112, %v1110
    %v1149 = vpack.c.b16 %v1113, %v1111
    %v1150 = vpack.c.b16 %v1116, %v1114
    %v1151 = vpack.c.b16 %v1117, %v1115
    %v1152 = vpack.c.b16 %v1120, %v1118
    %v1153 = vpack.c.b16 %v1121, %v1119
    %1186 = vmatpush.bf16.msra.mxu0 %v1136
    %1187 = vmatpush.bf16.msra.mxu0 %v1134
    %1188 = vmatpush.bf16.msra.mxu0 %v1132
    %1189 = vmatpush.bf16.msra.mxu0 %v1130
    %1190 = vmatpush.bf16.msra.mxu0 %v1128
    %1191 = vmatpush.bf16.msra.mxu0 %v1126
    %1192 = vmatpush.bf16.msra.mxu0 %v1124
    %1193 = vmatpush.bf16.msra.mxu0 %v1122
    %1194 = vmatmul.bf16.gmra.mxu0 %v990
    %v1195 = vpop.f32.mrf.mxu0
    %v1196 = vadd.f32 %v1024, %v1195
    %v1197 = vpop.f32.mrf.mxu0
    %1198 = vdwg.mxu0
    %1199 = vmatpush.bf16.msra.mxu0 %v1152
    %1200 = vmatpush.bf16.msra.mxu0 %v1150
    %1201 = vmatpush.bf16.msra.mxu0 %v1148
    %1202 = vmatpush.bf16.msra.mxu0 %v1146
    %1203 = vmatpush.bf16.msra.mxu0 %v1144
    %1204 = vmatpush.bf16.msra.mxu0 %v1142
    %1205 = vmatpush.bf16.msra.mxu0 %v1140
    %1206 = vmatpush.bf16.msra.mxu0 %v1138
    %1207 = vmatmul.bf16.gmra.mxu0 %v991
    %v1208 = vpop.f32.mrf.mxu0
    %v1209 = vadd.f32 %v1196, %v1208
    %v1210 = vpop.f32.mrf.mxu0
    %1211 = vdwg.mxu0
    %1212 = vmatpush.bf16.msra.mxu0 %v1137
    %1213 = vmatpush.bf16.msra.mxu0 %v1135
    %1214 = vmatpush.bf16.msra.mxu0 %v1133
    %1215 = vmatpush.bf16.msra.mxu0 %v1131
    %1216 = vmatpush.bf16.msra.mxu0 %v1129
    %1217 = vmatpush.bf16.msra.mxu0 %v1127
    %1218 = vmatpush.bf16.msra.mxu0 %v1125
    %1219 = vmatpush.bf16.msra.mxu0 %v1123
    %1220 = vmatmul.bf16.gmra.mxu0 %v990
    %v1221 = vpop.f32.mrf.mxu0
    %v1222 = vadd.f32 %v1025, %v1221
    %v1223 = vpop.f32.mrf.mxu0
    %1224 = vdwg.mxu0
    %1225 = vmatpush.bf16.msra.mxu0 %v1153
    %1226 = vmatpush.bf16.msra.mxu0 %v1151
    %1227 = vmatpush.bf16.msra.mxu0 %v1149
    %1228 = vmatpush.bf16.msra.mxu0 %v1147
    %1229 = vmatpush.bf16.msra.mxu0 %v1145
    %1230 = vmatpush.bf16.msra.mxu0 %v1143
    %1231 = vmatpush.bf16.msra.mxu0 %v1141
    %1232 = vmatpush.bf16.msra.mxu0 %v1139
    %1233 = vmatmul.bf16.gmra.mxu0 %v991
    %v1234 = vpop.f32.mrf.mxu0
    %v1235 = vadd.f32 %v1222, %v1234
    %v1236 = vpop.f32.mrf.mxu0
    %1237 = vdwg.mxu0
    %v1238 = vmax.f32 %v1235, -20.0
    %v1239 = vmin.f32 %v1238, 2.0
    %v1240 = vmul.f32 %v1239, 1.442695
    %v1241 = vpow.pop %v1240
    %v1242 = vld [vmem:[%s6] sm:$0xff]
    %v1243 = vmul.f32 %v1241, %v1242
    %v1244 = vadd.f32 %v1209, %v1243
    %v1245 = vtanh.pop %v1244
    %v1246 = vperm.slane %v102, 4
    %v1247 = vmul.f32 %v1245, %v1246
    %v1248 = vperm.slane %v103, 4
    %v1249 = vadd.f32 %v1247, %v1248
    %v1250 = vmul.f32 %v1242, -0.5
    %v1251 = vmul.f32 %v1250, %v1242
    %v1252 = vsub.f32 %v1251, %v1239
    %v1253 = vsub.f32 %v1252, 0.9189385
    %v1254 = vmul.f32 %v1245, %v1245
    %v1255 = vsub.f32 1.0, %v1254
    %v1256 = vmul.f32 %v1246, %v1255
    %v1257 = vadd.f32 %v1256, 1e-06
    %v1258 = vlog2.pop %v1257
    %v1259 = vmul.f32 %v1258, 0.6931472
    %v1260 = vsub.f32 %v1253, %v1259
    %vm1261 = vcmask 15360
    %v1262 = vsel %vm1261, %v1260, 0.0
    %1263 = vadd.xlane.f32.xlu0 %v1262
    %v1264 = vpop.xlane.xlu0 %1263
    %1265 = vst.msk [vmem:[%s7] sm:$0xff] %vm1261, %v1249
    %vm1266 = vcmask 1048568
    %1267 = vst.msk [vmem:[%s7] sm:$0xff] %vm1266, %v1264
    // Predicated region
    $region50: #{actor_forward.1} parent=1 // pred_check
      _
    $region51: #{actor_forward.1} parent=1 // pred_check_branch
      %1269 = sbr.rel (0) target = $region53
    $region52: #{actor_forward.1} parent=1 // pred_region
      _
    $region53: #{actor_forward.1} parent=1 // pred_fallthru
      _
    // Predicated region
    $region54: #{actor_forward.1} parent=1 // pred_check
      _
    $region55: #{actor_forward.1} parent=1 // pred_check_branch
      %1271 = sbr.rel (0) target = $region57
    $region56: #{actor_forward.1} parent=1 // pred_region
      _
    $region57: #{actor_forward.1} parent=1 // pred_fallthru
      _
    %1272 = vsyncpa [#allocation3], 1
    %1273 = vsyncpa [#allocation5], 1
    %1274 = vsyncpa [#allocation8], 1

</llo_original>
